<compile_context>
chip_gen: v7x
topology: tpu7x:2x2x1
jax: 0.10.0
libtpu: 0.0.40
codegen_flags: <defaults>
</compile_context>

<pallas_src>
import functools

import jax
import jax.numpy as jnp
from jax.experimental import pallas as pl
from jax.experimental.pallas import tpu as pltpu

LANE = 128
SUBLANE_BF16 = 16
LAYER_DIMS = [226, 452, 226, 240]  # backbone: 3 bias-free Linear + ReLU
N_BACKBONE = len(LAYER_DIMS) - 1


def _round_up(n: int, m: int) -> int:
    return ((n + m - 1) // m) * m


def _mlp_kernel(x_ref, w1_ref, w2_ref, w3_ref, wh_ref, out_ref):
    """Whole forward pass: 3 x (bf16 matmul + ReLU) + one fused head matmul."""
    h = x_ref[...].astype(jnp.bfloat16)
    for w_ref in (w1_ref, w2_ref, w3_ref):
        h = jnp.dot(h, w_ref[...], preferred_element_type=jnp.float32)
        h = jnp.maximum(h, 0.0).astype(jnp.bfloat16)
    out_ref[...] = jnp.dot(h, wh_ref[...], preferred_element_type=jnp.float32)


def prepare_params(backbone_ws, head_ws):
    """One-time: zero-pad to 128-lane multiples, cast to bf16, fuse ALL heads.

    backbone_ws: list of 3 (in, out) f32 weights (transposed vs nn.Linear).
    head_ws:     list of head weights, each (240, out_i)  (reg + class fused).
    Returns (padded_backbone_tuple, fused_head_weight, head_col_slices).
    """
    padded = []
    for w in backbone_ws:
        kp = _round_up(w.shape[0], LANE)
        np_ = _round_up(w.shape[1], LANE)
        padded.append(
            jnp.pad(w, ((0, kp - w.shape[0]), (0, np_ - w.shape[1])))
            .astype(jnp.bfloat16))

    head_cat = jnp.concatenate(head_ws, axis=1)  # (240, sum(out_i))
    kp = _round_up(head_cat.shape[0], LANE)
    np_ = _round_up(head_cat.shape[1], LANE)
    head_pad = (
        jnp.pad(head_cat, ((0, kp - head_cat.shape[0]),
                           (0, np_ - head_cat.shape[1])))
        .astype(jnp.bfloat16))

    col = 0
    slices = []
    for w in head_ws:
        slices.append((col, col + int(w.shape[1])))
        col += int(w.shape[1])
    return tuple(padded), head_pad, tuple(slices)


@jax.jit
def ln4_forward_fused(x, w1p, w2p, w3p, whp):
    """x: (B, 226) f32. w*p: pre-padded bf16 weights.

    Returns the fused, lane-dense (Bp, 128) f32 output slab containing every
    head's columns (reg then class_1..class_4).  Per-head column slicing is
    left to the consumer.
    """
    B, F0 = x.shape
    F0p = w1p.shape[0]
    out_cols = whp.shape[1]

    # bf16 activations -> pad batch to a multiple of 16 (bf16 min sublane tile).
    Bp0 = _round_up(max(B, SUBLANE_BF16), SUBLANE_BF16)
    TB = Bp0 if Bp0 <= 256 else 256          # rows per grid step
    Bp = _round_up(Bp0, TB)
    xp = jnp.pad(x, ((0, Bp - B), (0, F0p - F0)))

    grid = (Bp // TB,)
    in_specs = [
        pl.BlockSpec((TB, F0p), lambda i: (i, 0)),      # activations: stream
        pl.BlockSpec(w1p.shape, lambda i: (0, 0)),      # weights: VMEM-resident
        pl.BlockSpec(w2p.shape, lambda i: (0, 0)),
        pl.BlockSpec(w3p.shape, lambda i: (0, 0)),
        pl.BlockSpec(whp.shape, lambda i: (0, 0)),
    ]
    out_specs = pl.BlockSpec((TB, out_cols), lambda i: (i, 0))

    return pl.pallas_call(
        _mlp_kernel,
        out_shape=jax.ShapeDtypeStruct((Bp, out_cols), jnp.float32),
        grid=grid,
        in_specs=in_specs,
        out_specs=out_specs,
        compiler_params=pltpu.CompilerParams(
            # "arbitrary": keep the single weight DMA (don't duplicate ~704 KiB
            # of weights into each v7x TensorCore for a tiny batch).  Flip to
            # "parallel" only once per-core batch is several hundred rows.
            dimension_semantics=("arbitrary",)),
    )(xp, w1p, w2p, w3p, whp)


def split_heads(fused, batch, head_slices):
    """Consumer-side split of the fused output slab into per-head tensors."""
    return tuple(fused[:batch, lo:hi] for lo, hi in head_slices)


def ln4_reference(x, backbone_ws, head_ws):
    h = x
    for w in backbone_ws:
        h = jnp.maximum(h @ w, 0.0)
    return tuple(h @ hw for hw in head_ws)


def _make_weights(key):
    """Deterministic weights matching nn.Linear default init (uniform
    +-1/sqrt(fan_in)), stored as (in_features, out_features)."""
    backbone = []
    for i in range(N_BACKBONE):
        key, sub = jax.random.split(key)
        fan_in, fan_out = LAYER_DIMS[i], LAYER_DIMS[i + 1]
        bound = 1.0 / (fan_in ** 0.5)
        backbone.append(
            jax.random.uniform(sub, (fan_in, fan_out), jnp.float32, -bound, bound))

    last = LAYER_DIMS[-1]  # 240
    bound = 1.0 / (last ** 0.5)

    key, sub = jax.random.split(key)
    head_reg = jax.random.uniform(sub, (last, 4), jnp.float32, -bound, bound)

    heads_class = []
    for _ in range(4):
        key, sub = jax.random.split(key)
        heads_class.append(
            jax.random.uniform(sub, (last, 30), jnp.float32, -bound, bound))

    return backbone, head_reg, heads_class


if __name__ == "__main__":
    key = jax.random.PRNGKey(0)
    key, xkey = jax.random.split(key)

    batch = 8
    x = jax.random.normal(xkey, (batch, 226), jnp.float32)

    backbone_ws, head_w_reg, head_ws_class = _make_weights(key)

    # One-time parameter preparation: backbone padded once, reg + class heads
    # fused into a single 128-lane head matrix.
    all_head_ws = [head_w_reg] + head_ws_class
    bb_pad, head_pad, head_slices = prepare_params(backbone_ws, all_head_ws)

    # Single kernel launch serves both network_type paths.
    fused = ln4_forward_fused(x, *bb_pad, head_pad)
    fused = jax.block_until_ready(fused)

    # Consumer-side split (verification only; a real consumer would read the
    # fused slab directly).
    outs = split_heads(fused, batch, head_slices)
    out_reg = outs[0]            # network_type == 'reg'   : (B, 4)
    outs_class = outs[1:]        # network_type == 'class' : four (B, 30)

    ref = ln4_reference(x, backbone_ws, all_head_ws)

    for got, want in zip(outs, ref):
        assert got.shape == want.shape, (got.shape, want.shape)
        # bf16 weights/activations with f32 accumulation -> loosened tolerance.
        assert jnp.allclose(got, want, rtol=2e-2, atol=5e-3), \
            float(jnp.max(jnp.abs(got - want)))

    # Also exercise a larger batch so the batch-tiled grid path (grid > 1,
    # weights VMEM-resident across steps) is covered.
    key, xkey2 = jax.random.split(key)
    big_batch = 512
    x_big = jax.random.normal(xkey2, (big_batch, 226), jnp.float32)
    fused_big = jax.block_until_ready(ln4_forward_fused(x_big, *bb_pad, head_pad))
    outs_big = split_heads(fused_big, big_batch, head_slices)
    ref_big = ln4_reference(x_big, backbone_ws, all_head_ws)
    for got, want in zip(outs_big, ref_big):
        assert got.shape == want.shape, (got.shape, want.shape)
        assert jnp.allclose(got, want, rtol=2e-2, atol=5e-3), \
            float(jnp.max(jnp.abs(got - want)))

    print("KERNEL_OK")
</pallas_src>

<mosaic_0001>
module attributes {stable_mosaic.version = 11 : i64} {
  func.func @_mlp_kernel(%arg0: i32, %arg1: memref<16x256xf32, #tpu.memory_space<vmem>>, %arg2: memref<256x512xbf16, #tpu.memory_space<vmem>>, %arg3: memref<512x256xbf16, #tpu.memory_space<vmem>>, %arg4: memref<256x256xbf16, #tpu.memory_space<vmem>>, %arg5: memref<256x128xbf16, #tpu.memory_space<vmem>>, %arg6: memref<16x128xf32, #tpu.memory_space<vmem>>) attributes {dimension_semantics = [#tpu.dimension_semantics<arbitrary>], iteration_bounds = array<i64: 1>, scalar_prefetch = 0 : i64, scratch_operands = 0 : i64, tpu.core_type = #tpu.core_type<tc>, window_params = [{transform_indices = @transform_0, window_bounds = array<i64: 16, 256>}, {pipeline_mode = #tpu.pipeline_mode<synchronous>, transform_indices = @transform_1, window_bounds = array<i64: 256, 512>}, {pipeline_mode = #tpu.pipeline_mode<synchronous>, transform_indices = @transform_2, window_bounds = array<i64: 512, 256>}, {pipeline_mode = #tpu.pipeline_mode<synchronous>, transform_indices = @transform_3, window_bounds = array<i64: 256, 256>}, {pipeline_mode = #tpu.pipeline_mode<synchronous>, transform_indices = @transform_4, window_bounds = array<i64: 256, 128>}, {transform_indices = @transform_5, window_bounds = array<i64: 16, 128>}]} {
    %c0 = arith.constant 0 : index
    %c0_0 = arith.constant 0 : index
    %0 = vector.load %arg1[%c0, %c0_0] : memref<16x256xf32, #tpu.memory_space<vmem>>, vector<16x256xf32>
    %1 = arith.truncf %0 : vector<16x256xf32> to vector<16x256xbf16>
    %c0_1 = arith.constant 0 : index
    %c0_2 = arith.constant 0 : index
    %2 = vector.load %arg2[%c0_1, %c0_2] : memref<256x512xbf16, #tpu.memory_space<vmem>>, vector<256x512xbf16>
    %cst = arith.constant dense<0.000000e+00> : vector<16x512xf32>
    %3 = tpu.matmul %1, %2, %cst {dimension_numbers = #tpu.dot_dimension_numbers<[1], [0], [0], [1], [0, 0, 1, 1], [], []>} : vector<16x256xbf16>, vector<256x512xbf16>, vector<16x512xf32> -> vector<16x512xf32>
    %cst_3 = arith.constant 0.000000e+00 : f32
    %4 = vector.broadcast %cst_3 : f32 to vector<16x512xf32>
    %5 = arith.maximumf %3, %4 : vector<16x512xf32>
    %6 = arith.truncf %5 : vector<16x512xf32> to vector<16x512xbf16>
    %c0_4 = arith.constant 0 : index
    %c0_5 = arith.constant 0 : index
    %7 = vector.load %arg3[%c0_4, %c0_5] : memref<512x256xbf16, #tpu.memory_space<vmem>>, vector<512x256xbf16>
    %cst_6 = arith.constant dense<0.000000e+00> : vector<16x256xf32>
    %8 = tpu.matmul %6, %7, %cst_6 {dimension_numbers = #tpu.dot_dimension_numbers<[1], [0], [0], [1], [0, 0, 1, 1], [], []>} : vector<16x512xbf16>, vector<512x256xbf16>, vector<16x256xf32> -> vector<16x256xf32>
    %cst_7 = arith.constant 0.000000e+00 : f32
    %9 = vector.broadcast %cst_7 : f32 to vector<16x256xf32>
    %10 = arith.maximumf %8, %9 : vector<16x256xf32>
    %11 = arith.truncf %10 : vector<16x256xf32> to vector<16x256xbf16>
    %c0_8 = arith.constant 0 : index
    %c0_9 = arith.constant 0 : index
    %12 = vector.load %arg4[%c0_8, %c0_9] : memref<256x256xbf16, #tpu.memory_space<vmem>>, vector<256x256xbf16>
    %cst_10 = arith.constant dense<0.000000e+00> : vector<16x256xf32>
    %13 = tpu.matmul %11, %12, %cst_10 {dimension_numbers = #tpu.dot_dimension_numbers<[1], [0], [0], [1], [0, 0, 1, 1], [], []>} : vector<16x256xbf16>, vector<256x256xbf16>, vector<16x256xf32> -> vector<16x256xf32>
    %cst_11 = arith.constant 0.000000e+00 : f32
    %14 = vector.broadcast %cst_11 : f32 to vector<16x256xf32>
    %15 = arith.maximumf %13, %14 : vector<16x256xf32>
    %16 = arith.truncf %15 : vector<16x256xf32> to vector<16x256xbf16>
    %c0_12 = arith.constant 0 : index
    %c0_13 = arith.constant 0 : index
    %17 = vector.load %arg5[%c0_12, %c0_13] : memref<256x128xbf16, #tpu.memory_space<vmem>>, vector<256x128xbf16>
    %cst_14 = arith.constant dense<0.000000e+00> : vector<16x128xf32>
    %18 = tpu.matmul %16, %17, %cst_14 {dimension_numbers = #tpu.dot_dimension_numbers<[1], [0], [0], [1], [0, 0, 1, 1], [], []>} : vector<16x256xbf16>, vector<256x128xbf16>, vector<16x128xf32> -> vector<16x128xf32>
    %c0_15 = arith.constant 0 : index
    %c0_16 = arith.constant 0 : index
    %19 = vector.load %arg6[%c0_15, %c0_16] : memref<16x128xf32, #tpu.memory_space<vmem>>, vector<16x128xf32>
    tpu.vector_store %arg6[%c0_15, %c0_16], %18 {strides = array<i32>} : memref<16x128xf32, #tpu.memory_space<vmem>>, vector<16x128xf32>,
    return
  }
  func.func @transform_0(%arg0: i32) -> (i32, i32) {
    %c0_i32 = arith.constant 0 : i32
    %c0_i32_0 = arith.constant 0 : i32
    return %arg0, %c0_i32 : i32, i32
  }
  func.func @transform_1(%arg0: i32) -> (i32, i32) {
    %c0_i32 = arith.constant 0 : i32
    %c0_i32_0 = arith.constant 0 : i32
    %c0_i32_1 = arith.constant 0 : i32
    return %c0_i32, %c0_i32_0 : i32, i32
  }
  func.func @transform_2(%arg0: i32) -> (i32, i32) {
    %c0_i32 = arith.constant 0 : i32
    %c0_i32_0 = arith.constant 0 : i32
    %c0_i32_1 = arith.constant 0 : i32
    return %c0_i32, %c0_i32_0 : i32, i32
  }
  func.func @transform_3(%arg0: i32) -> (i32, i32) {
    %c0_i32 = arith.constant 0 : i32
    %c0_i32_0 = arith.constant 0 : i32
    %c0_i32_1 = arith.constant 0 : i32
    return %c0_i32, %c0_i32_0 : i32, i32
  }
  func.func @transform_4(%arg0: i32) -> (i32, i32) {
    %c0_i32 = arith.constant 0 : i32
    %c0_i32_0 = arith.constant 0 : i32
    %c0_i32_1 = arith.constant 0 : i32
    return %c0_i32, %c0_i32_0 : i32, i32
  }
  func.func @transform_5(%arg0: i32) -> (i32, i32) {
    %c0_i32 = arith.constant 0 : i32
    %c0_i32_0 = arith.constant 0 : i32
    return %arg0, %c0_i32 : i32, i32
  }
}

</mosaic_0001>

<llo_original>
// kernel: ln4_forward_fused.1
$region0: #{ln4_forward_fused.1}
  #allocation0 [shape = 'u32[]', space=smem, size = 0x4, offset = 0x4, fixed_abs, tag = 'smem constant byte address 0x4 - core index']
  #allocation1 [shape = 'u32[144,128]{1,0:T(1,128)}', space=vmem, size = 0x12000, scoped, tag = 'internal scratch']
  %s0 = inlined_call_operand.vmem [shape: f32[16,256], index: 0, kind: input, shape index: {}]
  %s1 = inlined_call_operand.hbm [shape: bf16[256,512], index: 1, kind: input, shape index: {}]
  %s2 = inlined_call_operand.hbm [shape: bf16[512,256], index: 2, kind: input, shape index: {}]
  %s3 = inlined_call_operand.hbm [shape: bf16[256,256], index: 3, kind: input, shape index: {}]
  %s4 = inlined_call_operand.hbm [shape: bf16[256,128], index: 4, kind: input, shape index: {}]
  %s5 = inlined_call_operand.hbm [shape: f32[16,128], index: 5, kind: output, shape index: {}]
  %s6 = sld [smem:[#allocation0]]
  $region46: #{ln4_forward_fused.1} parent=0
    _
  %s8 = ssub.s32 1, %s6
  %s9 = scalar_select 0, %s8, %s6
  $region1: #{ln4_forward_fused.1} parent=0
    #allocation2 [shape = 'u8[262144]{0}', space=vmem, size = 0x40000, scoped, tag = 'input window, operand 1, single buffered']
    #allocation3 [shape = 's32[1]{0}', space=sflag, size = 0x4, scoped, tag = 'scoped memory for ln4_forward_fused.1']
    #allocation4 [shape = 's32[1]{0}', space=sflag, size = 0x4, scoped, tag = 'scoped memory for ln4_forward_fused.1']
    #allocation5 [shape = 'u8[262144]{0}', space=vmem, size = 0x40000, scoped, tag = 'input window, operand 2, single buffered']
    #allocation6 [shape = 's32[1]{0}', space=sflag, size = 0x4, scoped, tag = 'scoped memory for ln4_forward_fused.1']
    #allocation7 [shape = 'u8[131072]{0}', space=vmem, size = 0x20000, scoped, tag = 'input window, operand 3, single buffered']
    #allocation8 [shape = 'u8[65536]{0}', space=vmem, size = 0x10000, scoped, tag = 'input window, operand 4, single buffered']
    #allocation9 [shape = 's32[1]{0}', space=sflag, size = 0x4, scoped, tag = 'scoped memory for ln4_forward_fused.1']
    #allocation10 [shape = 'u8[8192]{0}', space=vmem, size = 0x2000, scoped, tag = 'output window, operand 0, single buffered']
    %10 = vsyncpa [#allocation3], 0
    %11 = vsyncpa [#allocation6], 0
    %12 = vsyncpa [#allocation9], 0
    %13 = vsyncpa [#allocation4], 0
    // Predicated region
    $region2: #{ln4_forward_fused.1} parent=1 // pred_check
      _
    $region3: #{ln4_forward_fused.1} parent=1 // pred_check_branch
      %15 = sbr.rel (0) target = $region5
    $region4: #{ln4_forward_fused.1} parent=1 // pred_region
      _
    $region5: #{ln4_forward_fused.1} parent=1 // pred_fallthru
      _
    // Predicated region
    $region6: #{ln4_forward_fused.1} parent=1 // pred_check
      _
    $region7: #{ln4_forward_fused.1} parent=1 // pred_check_branch
      %17 = sbr.rel (0) target = $region9
    $region8: #{ln4_forward_fused.1} parent=1 // pred_region
      %s19 = ssub.s32 8192, 8192
      %20 = vsyncadd [#allocation3], %s19
      %s21 = sshll.u32 [#allocation2], 4
      %s22 = int_to_ptr.vmem [resolvable:$true] %s21
      %27 = dma.hbm_to_vmem [thread:$0]  %s1, 8192, %s22, [#allocation3], 256, 256, 16
    $region9: #{ln4_forward_fused.1} parent=1 // pred_fallthru
      _
    // Predicated region
    $region10: #{ln4_forward_fused.1} parent=1 // pred_check
      _
    $region11: #{ln4_forward_fused.1} parent=1 // pred_check_branch
      %29 = sbr.rel (0) target = $region13
    $region12: #{ln4_forward_fused.1} parent=1 // pred_region
      %s31 = ssub.s32 8192, 8192
      %32 = vsyncadd [#allocation6], %s31
      %s33 = sshll.u32 [#allocation5], 4
      %s34 = int_to_ptr.vmem [resolvable:$true] %s33
      %39 = dma.hbm_to_vmem [thread:$0]  %s2, 8192, %s34, [#allocation6], 128, 128, 8
    $region13: #{ln4_forward_fused.1} parent=1 // pred_fallthru
      _
    // Predicated region
    $region14: #{ln4_forward_fused.1} parent=1 // pred_check
      _
    $region15: #{ln4_forward_fused.1} parent=1 // pred_check_branch
      %41 = sbr.rel (0) target = $region17
    $region16: #{ln4_forward_fused.1} parent=1 // pred_region
      %s43 = ssub.s32 4096, 4096
      %44 = vsyncadd [#allocation6], %s43
      %s45 = sshll.u32 [#allocation7], 4
      %s46 = int_to_ptr.vmem [resolvable:$true] %s45
      %51 = dma.hbm_to_vmem [thread:$0]  %s3, 4096, %s46, [#allocation6], 128, 128, 8
    $region17: #{ln4_forward_fused.1} parent=1 // pred_fallthru
      _
    // Predicated region
    $region18: #{ln4_forward_fused.1} parent=1 // pred_check
      _
    $region19: #{ln4_forward_fused.1} parent=1 // pred_check_branch
      %53 = sbr.rel (0) target = $region21
    $region20: #{ln4_forward_fused.1} parent=1 // pred_region
      %s55 = ssub.s32 2048, 2048
      %56 = vsyncadd [#allocation9], %s55
      %s57 = sshll.u32 [#allocation8], 4
      %s58 = int_to_ptr.vmem [resolvable:$true] %s57
      %63 = dma.hbm_to_vmem [thread:$0]  %s4, 2048, %s58, [#allocation9], 64, 64, 4
    $region21: #{ln4_forward_fused.1} parent=1 // pred_fallthru
      _
    // Predicated region
    $region22: #{ln4_forward_fused.1} parent=1 // pred_check
      _
    $region23: #{ln4_forward_fused.1} parent=1 // pred_check_branch
      %65 = sbr.rel (0) target = $region25
    $region24: #{ln4_forward_fused.1} parent=1 // pred_region
      %66 = dma.done [#allocation3], 8192
    $region25: #{ln4_forward_fused.1} parent=1 // pred_fallthru
      _
    // Predicated region
    $region26: #{ln4_forward_fused.1} parent=1 // pred_check
      _
    $region27: #{ln4_forward_fused.1} parent=1 // pred_check_branch
      %68 = sbr.rel (0) target = $region29
    $region28: #{ln4_forward_fused.1} parent=1 // pred_region
      %69 = dma.done [#allocation6], 8192
    $region29: #{ln4_forward_fused.1} parent=1 // pred_fallthru
      _
    // Predicated region
    $region30: #{ln4_forward_fused.1} parent=1 // pred_check
      _
    $region31: #{ln4_forward_fused.1} parent=1 // pred_check_branch
      %71 = sbr.rel (0) target = $region33
    $region32: #{ln4_forward_fused.1} parent=1 // pred_region
      %72 = dma.done [#allocation6], 4096
    $region33: #{ln4_forward_fused.1} parent=1 // pred_fallthru
      _
    // Predicated region
    $region34: #{ln4_forward_fused.1} parent=1 // pred_check
      _
    $region35: #{ln4_forward_fused.1} parent=1 // pred_check_branch
      %74 = sbr.rel (0) target = $region37
    $region36: #{ln4_forward_fused.1} parent=1 // pred_region
      %75 = dma.done [#allocation9], 2048
    $region37: #{ln4_forward_fused.1} parent=1 // pred_fallthru
      _
    %v77 = vld [vmem:[%s0] sm:$0xff]
    %v78 = vld [vmem:[%s0 + $0x8] sm:$0xff]
    %v79 = vld [vmem:[%s0 + $0x10] sm:$0xff]
    %v80 = vld [vmem:[%s0 + $0x18] sm:$0xff]
    %v81 = vpack.c.bf16 %v79, %v77
    %v82 = vpack.c.bf16 %v80, %v78
    %v83 = vld [vmem:[#allocation2] sm:$0xff]
    %v84 = vld [vmem:[#allocation2 + $0x8] sm:$0xff]
    %v85 = vld [vmem:[#allocation2 + $0x10] sm:$0xff]
    %v86 = vld [vmem:[#allocation2 + $0x18] sm:$0xff]
    %v87 = vld [vmem:[#allocation2 + $0x20] sm:$0xff]
    %v88 = vld [vmem:[#allocation2 + $0x28] sm:$0xff]
    %v89 = vld [vmem:[#allocation2 + $0x30] sm:$0xff]
    %v90 = vld [vmem:[#allocation2 + $0x38] sm:$0xff]
    %v91 = vld [vmem:[#allocation2 + $0x40] sm:$0xff]
    %v92 = vld [vmem:[#allocation2 + $0x48] sm:$0xff]
    %v93 = vld [vmem:[#allocation2 + $0x50] sm:$0xff]
    %v94 = vld [vmem:[#allocation2 + $0x58] sm:$0xff]
    %v95 = vld [vmem:[#allocation2 + $0x60] sm:$0xff]
    %v96 = vld [vmem:[#allocation2 + $0x68] sm:$0xff]
    %v97 = vld [vmem:[#allocation2 + $0x70] sm:$0xff]
    %v98 = vld [vmem:[#allocation2 + $0x78] sm:$0xff]
    %v99 = vld [vmem:[#allocation2 + $0x80] sm:$0xff]
    %v100 = vld [vmem:[#allocation2 + $0x88] sm:$0xff]
    %v101 = vld [vmem:[#allocation2 + $0x90] sm:$0xff]
    %v102 = vld [vmem:[#allocation2 + $0x98] sm:$0xff]
    %v103 = vld [vmem:[#allocation2 + $0xa0] sm:$0xff]
    %v104 = vld [vmem:[#allocation2 + $0xa8] sm:$0xff]
    %v105 = vld [vmem:[#allocation2 + $0xb0] sm:$0xff]
    %v106 = vld [vmem:[#allocation2 + $0xb8] sm:$0xff]
    %v107 = vld [vmem:[#allocation2 + $0xc0] sm:$0xff]
    %v108 = vld [vmem:[#allocation2 + $0xc8] sm:$0xff]
    %v109 = vld [vmem:[#allocation2 + $0xd0] sm:$0xff]
    %v110 = vld [vmem:[#allocation2 + $0xd8] sm:$0xff]
    %v111 = vld [vmem:[#allocation2 + $0xe0] sm:$0xff]
    %v112 = vld [vmem:[#allocation2 + $0xe8] sm:$0xff]
    %v113 = vld [vmem:[#allocation2 + $0xf0] sm:$0xff]
    %v114 = vld [vmem:[#allocation2 + $0xf8] sm:$0xff]
    %v115 = vld [vmem:[#allocation2 + $0x100] sm:$0xff]
    %v116 = vld [vmem:[#allocation2 + $0x108] sm:$0xff]
    %v117 = vld [vmem:[#allocation2 + $0x110] sm:$0xff]
    %v118 = vld [vmem:[#allocation2 + $0x118] sm:$0xff]
    %v119 = vld [vmem:[#allocation2 + $0x120] sm:$0xff]
    %v120 = vld [vmem:[#allocation2 + $0x128] sm:$0xff]
    %v121 = vld [vmem:[#allocation2 + $0x130] sm:$0xff]
    %v122 = vld [vmem:[#allocation2 + $0x138] sm:$0xff]
    %v123 = vld [vmem:[#allocation2 + $0x140] sm:$0xff]
    %v124 = vld [vmem:[#allocation2 + $0x148] sm:$0xff]
    %v125 = vld [vmem:[#allocation2 + $0x150] sm:$0xff]
    %v126 = vld [vmem:[#allocation2 + $0x158] sm:$0xff]
    %v127 = vld [vmem:[#allocation2 + $0x160] sm:$0xff]
    %v128 = vld [vmem:[#allocation2 + $0x168] sm:$0xff]
    %v129 = vld [vmem:[#allocation2 + $0x170] sm:$0xff]
    %v130 = vld [vmem:[#allocation2 + $0x178] sm:$0xff]
    %v131 = vld [vmem:[#allocation2 + $0x180] sm:$0xff]
    %v132 = vld [vmem:[#allocation2 + $0x188] sm:$0xff]
    %v133 = vld [vmem:[#allocation2 + $0x190] sm:$0xff]
    %v134 = vld [vmem:[#allocation2 + $0x198] sm:$0xff]
    %v135 = vld [vmem:[#allocation2 + $0x1a0] sm:$0xff]
    %v136 = vld [vmem:[#allocation2 + $0x1a8] sm:$0xff]
    %v137 = vld [vmem:[#allocation2 + $0x1b0] sm:$0xff]
    %v138 = vld [vmem:[#allocation2 + $0x1b8] sm:$0xff]
    %v139 = vld [vmem:[#allocation2 + $0x1c0] sm:$0xff]
    %v140 = vld [vmem:[#allocation2 + $0x1c8] sm:$0xff]
    %v141 = vld [vmem:[#allocation2 + $0x1d0] sm:$0xff]
    %v142 = vld [vmem:[#allocation2 + $0x1d8] sm:$0xff]
    %v143 = vld [vmem:[#allocation2 + $0x1e0] sm:$0xff]
    %v144 = vld [vmem:[#allocation2 + $0x1e8] sm:$0xff]
    %v145 = vld [vmem:[#allocation2 + $0x1f0] sm:$0xff]
    %v146 = vld [vmem:[#allocation2 + $0x1f8] sm:$0xff]
    %v211 = vunpack.c.l.b16 %v83
    %v212 = vunpack.c.h.b16 %v83
    %v213 = vunpack.c.l.b16 %v84
    %v214 = vunpack.c.h.b16 %v84
    %v215 = vunpack.c.l.b16 %v85
    %v216 = vunpack.c.h.b16 %v85
    %v217 = vunpack.c.l.b16 %v86
    %v218 = vunpack.c.h.b16 %v86
    %v219 = vunpack.c.l.b16 %v87
    %v220 = vunpack.c.h.b16 %v87
    %v221 = vunpack.c.l.b16 %v88
    %v222 = vunpack.c.h.b16 %v88
    %v223 = vunpack.c.l.b16 %v89
    %v224 = vunpack.c.h.b16 %v89
    %v225 = vunpack.c.l.b16 %v90
    %v226 = vunpack.c.h.b16 %v90
    %v227 = vunpack.c.l.b16 %v91
    %v228 = vunpack.c.h.b16 %v91
    %v229 = vunpack.c.l.b16 %v92
    %v230 = vunpack.c.h.b16 %v92
    %v231 = vunpack.c.l.b16 %v93
    %v232 = vunpack.c.h.b16 %v93
    %v233 = vunpack.c.l.b16 %v94
    %v234 = vunpack.c.h.b16 %v94
    %v235 = vunpack.c.l.b16 %v95
    %v236 = vunpack.c.h.b16 %v95
    %v237 = vunpack.c.l.b16 %v96
    %v238 = vunpack.c.h.b16 %v96
    %v239 = vunpack.c.l.b16 %v97
    %v240 = vunpack.c.h.b16 %v97
    %v241 = vunpack.c.l.b16 %v98
    %v242 = vunpack.c.h.b16 %v98
    %v243 = vunpack.c.l.b16 %v99
    %v244 = vunpack.c.h.b16 %v99
    %v245 = vunpack.c.l.b16 %v100
    %v246 = vunpack.c.h.b16 %v100
    %v247 = vunpack.c.l.b16 %v101
    %v248 = vunpack.c.h.b16 %v101
    %v249 = vunpack.c.l.b16 %v102
    %v250 = vunpack.c.h.b16 %v102
    %v251 = vunpack.c.l.b16 %v103
    %v252 = vunpack.c.h.b16 %v103
    %v253 = vunpack.c.l.b16 %v104
    %v254 = vunpack.c.h.b16 %v104
    %v255 = vunpack.c.l.b16 %v105
    %v256 = vunpack.c.h.b16 %v105
    %v257 = vunpack.c.l.b16 %v106
    %v258 = vunpack.c.h.b16 %v106
    %v259 = vunpack.c.l.b16 %v107
    %v260 = vunpack.c.h.b16 %v107
    %v261 = vunpack.c.l.b16 %v108
    %v262 = vunpack.c.h.b16 %v108
    %v263 = vunpack.c.l.b16 %v109
    %v264 = vunpack.c.h.b16 %v109
    %v265 = vunpack.c.l.b16 %v110
    %v266 = vunpack.c.h.b16 %v110
    %v267 = vunpack.c.l.b16 %v111
    %v268 = vunpack.c.h.b16 %v111
    %v269 = vunpack.c.l.b16 %v112
    %v270 = vunpack.c.h.b16 %v112
    %v271 = vunpack.c.l.b16 %v113
    %v272 = vunpack.c.h.b16 %v113
    %v273 = vunpack.c.l.b16 %v114
    %v274 = vunpack.c.h.b16 %v114
    %v275 = vunpack.c.l.b16 %v115
    %v276 = vunpack.c.h.b16 %v115
    %v277 = vunpack.c.l.b16 %v116
    %v278 = vunpack.c.h.b16 %v116
    %v279 = vunpack.c.l.b16 %v117
    %v280 = vunpack.c.h.b16 %v117
    %v281 = vunpack.c.l.b16 %v118
    %v282 = vunpack.c.h.b16 %v118
    %v283 = vunpack.c.l.b16 %v119
    %v284 = vunpack.c.h.b16 %v119
    %v285 = vunpack.c.l.b16 %v120
    %v286 = vunpack.c.h.b16 %v120
    %v287 = vunpack.c.l.b16 %v121
    %v288 = vunpack.c.h.b16 %v121
    %v289 = vunpack.c.l.b16 %v122
    %v290 = vunpack.c.h.b16 %v122
    %v291 = vunpack.c.l.b16 %v123
    %v292 = vunpack.c.h.b16 %v123
    %v293 = vunpack.c.l.b16 %v124
    %v294 = vunpack.c.h.b16 %v124
    %v295 = vunpack.c.l.b16 %v125
    %v296 = vunpack.c.h.b16 %v125
    %v297 = vunpack.c.l.b16 %v126
    %v298 = vunpack.c.h.b16 %v126
    %v299 = vunpack.c.l.b16 %v127
    %v300 = vunpack.c.h.b16 %v127
    %v301 = vunpack.c.l.b16 %v128
    %v302 = vunpack.c.h.b16 %v128
    %v303 = vunpack.c.l.b16 %v129
    %v304 = vunpack.c.h.b16 %v129
    %v305 = vunpack.c.l.b16 %v130
    %v306 = vunpack.c.h.b16 %v130
    %v307 = vunpack.c.l.b16 %v131
    %v308 = vunpack.c.h.b16 %v131
    %v309 = vunpack.c.l.b16 %v132
    %v310 = vunpack.c.h.b16 %v132
    %v311 = vunpack.c.l.b16 %v133
    %v312 = vunpack.c.h.b16 %v133
    %v313 = vunpack.c.l.b16 %v134
    %v314 = vunpack.c.h.b16 %v134
    %v315 = vunpack.c.l.b16 %v135
    %v316 = vunpack.c.h.b16 %v135
    %v317 = vunpack.c.l.b16 %v136
    %v318 = vunpack.c.h.b16 %v136
    %v319 = vunpack.c.l.b16 %v137
    %v320 = vunpack.c.h.b16 %v137
    %v321 = vunpack.c.l.b16 %v138
    %v322 = vunpack.c.h.b16 %v138
    %v323 = vunpack.c.l.b16 %v139
    %v324 = vunpack.c.h.b16 %v139
    %v325 = vunpack.c.l.b16 %v140
    %v326 = vunpack.c.h.b16 %v140
    %v327 = vunpack.c.l.b16 %v141
    %v328 = vunpack.c.h.b16 %v141
    %v329 = vunpack.c.l.b16 %v142
    %v330 = vunpack.c.h.b16 %v142
    %v331 = vunpack.c.l.b16 %v143
    %v332 = vunpack.c.h.b16 %v143
    %v333 = vunpack.c.l.b16 %v144
    %v334 = vunpack.c.h.b16 %v144
    %v335 = vunpack.c.l.b16 %v145
    %v336 = vunpack.c.h.b16 %v145
    %v337 = vunpack.c.l.b16 %v146
    %v338 = vunpack.c.h.b16 %v146
    %v339 = vpack.c.b16 %v215, %v211
    %v340 = vpack.c.b16 %v216, %v212
    %v341 = vpack.c.b16 %v217, %v213
    %v342 = vpack.c.b16 %v218, %v214
    %v343 = vpack.c.b16 %v223, %v219
    %v344 = vpack.c.b16 %v224, %v220
    %v345 = vpack.c.b16 %v225, %v221
    %v346 = vpack.c.b16 %v226, %v222
    %v347 = vpack.c.b16 %v231, %v227
    %v348 = vpack.c.b16 %v232, %v228
    %v349 = vpack.c.b16 %v233, %v229
    %v350 = vpack.c.b16 %v234, %v230
    %v351 = vpack.c.b16 %v239, %v235
    %v352 = vpack.c.b16 %v240, %v236
    %v353 = vpack.c.b16 %v241, %v237
    %v354 = vpack.c.b16 %v242, %v238
    %v355 = vpack.c.b16 %v247, %v243
    %v356 = vpack.c.b16 %v248, %v244
    %v357 = vpack.c.b16 %v249, %v245
    %v358 = vpack.c.b16 %v250, %v246
    %v359 = vpack.c.b16 %v255, %v251
    %v360 = vpack.c.b16 %v256, %v252
    %v361 = vpack.c.b16 %v257, %v253
    %v362 = vpack.c.b16 %v258, %v254
    %v363 = vpack.c.b16 %v263, %v259
    %v364 = vpack.c.b16 %v264, %v260
    %v365 = vpack.c.b16 %v265, %v261
    %v366 = vpack.c.b16 %v266, %v262
    %v367 = vpack.c.b16 %v271, %v267
    %v368 = vpack.c.b16 %v272, %v268
    %v369 = vpack.c.b16 %v273, %v269
    %v370 = vpack.c.b16 %v274, %v270
    %v371 = vpack.c.b16 %v279, %v275
    %v372 = vpack.c.b16 %v280, %v276
    %v373 = vpack.c.b16 %v281, %v277
    %v374 = vpack.c.b16 %v282, %v278
    %v375 = vpack.c.b16 %v287, %v283
    %v376 = vpack.c.b16 %v288, %v284
    %v377 = vpack.c.b16 %v289, %v285
    %v378 = vpack.c.b16 %v290, %v286
    %v379 = vpack.c.b16 %v295, %v291
    %v380 = vpack.c.b16 %v296, %v292
    %v381 = vpack.c.b16 %v297, %v293
    %v382 = vpack.c.b16 %v298, %v294
    %v383 = vpack.c.b16 %v303, %v299
    %v384 = vpack.c.b16 %v304, %v300
    %v385 = vpack.c.b16 %v305, %v301
    %v386 = vpack.c.b16 %v306, %v302
    %v387 = vpack.c.b16 %v311, %v307
    %v388 = vpack.c.b16 %v312, %v308
    %v389 = vpack.c.b16 %v313, %v309
    %v390 = vpack.c.b16 %v314, %v310
    %v391 = vpack.c.b16 %v319, %v315
    %v392 = vpack.c.b16 %v320, %v316
    %v393 = vpack.c.b16 %v321, %v317
    %v394 = vpack.c.b16 %v322, %v318
    %v395 = vpack.c.b16 %v327, %v323
    %v396 = vpack.c.b16 %v328, %v324
    %v397 = vpack.c.b16 %v329, %v325
    %v398 = vpack.c.b16 %v330, %v326
    %v399 = vpack.c.b16 %v335, %v331
    %v400 = vpack.c.b16 %v336, %v332
    %v401 = vpack.c.b16 %v337, %v333
    %v402 = vpack.c.b16 %v338, %v334
    %467 = vmatprep.subr.bf16.mxu0 %v340
    %468 = vmatpush1.bf16.msra.mxu0 %v339
    %469 = vmatprep.subr.bf16.mxu0 %v344
    %470 = vmatpush1.bf16.msra.mxu0 %v343
    %471 = vmatprep.subr.bf16.mxu0 %v348
    %472 = vmatpush1.bf16.msra.mxu0 %v347
    %473 = vmatprep.subr.bf16.mxu0 %v352
    %474 = vmatpush1.bf16.msra.mxu0 %v351
    %475 = vmatprep.subr.bf16.mxu0 %v356
    %476 = vmatpush1.bf16.msra.mxu0 %v355
    %477 = vmatprep.subr.bf16.mxu0 %v360
    %478 = vmatpush1.bf16.msra.mxu0 %v359
    %479 = vmatprep.subr.bf16.mxu0 %v364
    %480 = vmatpush1.bf16.msra.mxu0 %v363
    %481 = vmatprep.subr.bf16.mxu0 %v368
    %482 = vmatpush1.bf16.msra.mxu0 %v367
    %483 = vmatprep.subr.bf16.mxu0 %v372
    %484 = vmatpush1.bf16.msra.mxu0 %v371
    %485 = vmatprep.subr.bf16.mxu0 %v376
    %486 = vmatpush1.bf16.msra.mxu0 %v375
    %487 = vmatprep.subr.bf16.mxu0 %v380
    %488 = vmatpush1.bf16.msra.mxu0 %v379
    %489 = vmatprep.subr.bf16.mxu0 %v384
    %490 = vmatpush1.bf16.msra.mxu0 %v383
    %491 = vmatprep.subr.bf16.mxu0 %v388
    %492 = vmatpush1.bf16.msra.mxu0 %v387
    %493 = vmatprep.subr.bf16.mxu0 %v392
    %494 = vmatpush1.bf16.msra.mxu0 %v391
    %495 = vmatprep.subr.bf16.mxu0 %v396
    %496 = vmatpush1.bf16.msra.mxu0 %v395
    %497 = vmatprep.subr.bf16.mxu0 %v400
    %498 = vmatpush1.bf16.msra.mxu0 %v399
    %499 = vmatprep.mubr.bf16.mxu0 %v82
    %500 = vmatmul.mubr.bf16.gmra.mrb[0].mxu0 %v81
    %v501 = vpop.f32.mrb[0].mxu0
    %v502 = vadd.f32 0.0, %v501
    %v503 = vpop.f32.mrb[0].mxu0
    %v504 = vadd.f32 0.0, %v503
    %v505 = vpop.f32.mrb[0].mxu0
    %v506 = vadd.f32 0.0, %v505
    %v507 = vpop.f32.mrb[0].mxu0
    %v508 = vadd.f32 0.0, %v507
    %509 = vdwg.mxu0
    %510 = vmatprep.subr.bf16.mxu0 %v342
    %511 = vmatpush1.bf16.msra.mxu0 %v341
    %512 = vmatprep.subr.bf16.mxu0 %v346
    %513 = vmatpush1.bf16.msra.mxu0 %v345
    %514 = vmatprep.subr.bf16.mxu0 %v350
    %515 = vmatpush1.bf16.msra.mxu0 %v349
    %516 = vmatprep.subr.bf16.mxu0 %v354
    %517 = vmatpush1.bf16.msra.mxu0 %v353
    %518 = vmatprep.subr.bf16.mxu0 %v358
    %519 = vmatpush1.bf16.msra.mxu0 %v357
    %520 = vmatprep.subr.bf16.mxu0 %v362
    %521 = vmatpush1.bf16.msra.mxu0 %v361
    %522 = vmatprep.subr.bf16.mxu0 %v366
    %523 = vmatpush1.bf16.msra.mxu0 %v365
    %524 = vmatprep.subr.bf16.mxu0 %v370
    %525 = vmatpush1.bf16.msra.mxu0 %v369
    %526 = vmatprep.subr.bf16.mxu0 %v374
    %527 = vmatpush1.bf16.msra.mxu0 %v373
    %528 = vmatprep.subr.bf16.mxu0 %v378
    %529 = vmatpush1.bf16.msra.mxu0 %v377
    %530 = vmatprep.subr.bf16.mxu0 %v382
    %531 = vmatpush1.bf16.msra.mxu0 %v381
    %532 = vmatprep.subr.bf16.mxu0 %v386
    %533 = vmatpush1.bf16.msra.mxu0 %v385
    %534 = vmatprep.subr.bf16.mxu0 %v390
    %535 = vmatpush1.bf16.msra.mxu0 %v389
    %536 = vmatprep.subr.bf16.mxu0 %v394
    %537 = vmatpush1.bf16.msra.mxu0 %v393
    %538 = vmatprep.subr.bf16.mxu0 %v398
    %539 = vmatpush1.bf16.msra.mxu0 %v397
    %540 = vmatprep.subr.bf16.mxu0 %v402
    %541 = vmatpush1.bf16.msra.mxu0 %v401
    %542 = vmatprep.mubr.bf16.mxu0 %v82
    %543 = vmatmul.mubr.bf16.gmra.mrb[0].mxu0 %v81
    %v544 = vpop.f32.mrb[0].mxu0
    %v545 = vadd.f32 0.0, %v544
    %v546 = vpop.f32.mrb[0].mxu0
    %v547 = vadd.f32 0.0, %v546
    %v548 = vpop.f32.mrb[0].mxu0
    %v549 = vadd.f32 0.0, %v548
    %v550 = vpop.f32.mrb[0].mxu0
    %v551 = vadd.f32 0.0, %v550
    %552 = vdwg.mxu0
    %v553 = vmax.f32 %v502, 0.0
    %v554 = vmax.f32 %v504, 0.0
    %v555 = vmax.f32 %v545, 0.0
    %v556 = vmax.f32 %v547, 0.0
    %v557 = vmax.f32 %v506, 0.0
    %v558 = vmax.f32 %v508, 0.0
    %v559 = vmax.f32 %v549, 0.0
    %v560 = vmax.f32 %v551, 0.0
    %v561 = vpack.c.bf16 %v557, %v553
    %v562 = vpack.c.bf16 %v558, %v554
    %v563 = vpack.c.bf16 %v559, %v555
    %v564 = vpack.c.bf16 %v560, %v556
    %v565 = vld [vmem:[#allocation5] sm:$0xff]
    %v566 = vld [vmem:[#allocation5 + $0x8] sm:$0xff]
    %v567 = vld [vmem:[#allocation5 + $0x10] sm:$0xff]
    %v568 = vld [vmem:[#allocation5 + $0x18] sm:$0xff]
    %v569 = vld [vmem:[#allocation5 + $0x20] sm:$0xff]
    %v570 = vld [vmem:[#allocation5 + $0x28] sm:$0xff]
    %v571 = vld [vmem:[#allocation5 + $0x30] sm:$0xff]
    %v572 = vld [vmem:[#allocation5 + $0x38] sm:$0xff]
    %v573 = vld [vmem:[#allocation5 + $0x40] sm:$0xff]
    %v574 = vld [vmem:[#allocation5 + $0x48] sm:$0xff]
    %v575 = vld [vmem:[#allocation5 + $0x50] sm:$0xff]
    %v576 = vld [vmem:[#allocation5 + $0x58] sm:$0xff]
    %v577 = vld [vmem:[#allocation5 + $0x60] sm:$0xff]
    %v578 = vld [vmem:[#allocation5 + $0x68] sm:$0xff]
    %v579 = vld [vmem:[#allocation5 + $0x70] sm:$0xff]
    %v580 = vld [vmem:[#allocation5 + $0x78] sm:$0xff]
    %v581 = vld [vmem:[#allocation5 + $0x80] sm:$0xff]
    %v582 = vld [vmem:[#allocation5 + $0x88] sm:$0xff]
    %v583 = vld [vmem:[#allocation5 + $0x90] sm:$0xff]
    %v584 = vld [vmem:[#allocation5 + $0x98] sm:$0xff]
    %v585 = vld [vmem:[#allocation5 + $0xa0] sm:$0xff]
    %v586 = vld [vmem:[#allocation5 + $0xa8] sm:$0xff]
    %v587 = vld [vmem:[#allocation5 + $0xb0] sm:$0xff]
    %v588 = vld [vmem:[#allocation5 + $0xb8] sm:$0xff]
    %v589 = vld [vmem:[#allocation5 + $0xc0] sm:$0xff]
    %v590 = vld [vmem:[#allocation5 + $0xc8] sm:$0xff]
    %v591 = vld [vmem:[#allocation5 + $0xd0] sm:$0xff]
    %v592 = vld [vmem:[#allocation5 + $0xd8] sm:$0xff]
    %v593 = vld [vmem:[#allocation5 + $0xe0] sm:$0xff]
    %v594 = vld [vmem:[#allocation5 + $0xe8] sm:$0xff]
    %v595 = vld [vmem:[#allocation5 + $0xf0] sm:$0xff]
    %v596 = vld [vmem:[#allocation5 + $0xf8] sm:$0xff]
    %v597 = vld [vmem:[#allocation5 + $0x100] sm:$0xff]
    %v598 = vld [vmem:[#allocation5 + $0x108] sm:$0xff]
    %v599 = vld [vmem:[#allocation5 + $0x110] sm:$0xff]
    %v600 = vld [vmem:[#allocation5 + $0x118] sm:$0xff]
    %v601 = vld [vmem:[#allocation5 + $0x120] sm:$0xff]
    %v602 = vld [vmem:[#allocation5 + $0x128] sm:$0xff]
    %v603 = vld [vmem:[#allocation5 + $0x130] sm:$0xff]
    %v604 = vld [vmem:[#allocation5 + $0x138] sm:$0xff]
    %v605 = vld [vmem:[#allocation5 + $0x140] sm:$0xff]
    %v606 = vld [vmem:[#allocation5 + $0x148] sm:$0xff]
    %v607 = vld [vmem:[#allocation5 + $0x150] sm:$0xff]
    %v608 = vld [vmem:[#allocation5 + $0x158] sm:$0xff]
    %v609 = vld [vmem:[#allocation5 + $0x160] sm:$0xff]
    %v610 = vld [vmem:[#allocation5 + $0x168] sm:$0xff]
    %v611 = vld [vmem:[#allocation5 + $0x170] sm:$0xff]
    %v612 = vld [vmem:[#allocation5 + $0x178] sm:$0xff]
    %v613 = vld [vmem:[#allocation5 + $0x180] sm:$0xff]
    %v614 = vld [vmem:[#allocation5 + $0x188] sm:$0xff]
    %v615 = vld [vmem:[#allocation5 + $0x190] sm:$0xff]
    %v616 = vld [vmem:[#allocation5 + $0x198] sm:$0xff]
    %v617 = vld [vmem:[#allocation5 + $0x1a0] sm:$0xff]
    %v618 = vld [vmem:[#allocation5 + $0x1a8] sm:$0xff]
    %v619 = vld [vmem:[#allocation5 + $0x1b0] sm:$0xff]
    %v620 = vld [vmem:[#allocation5 + $0x1b8] sm:$0xff]
    %v621 = vld [vmem:[#allocation5 + $0x1c0] sm:$0xff]
    %v622 = vld [vmem:[#allocation5 + $0x1c8] sm:$0xff]
    %v623 = vld [vmem:[#allocation5 + $0x1d0] sm:$0xff]
    %v624 = vld [vmem:[#allocation5 + $0x1d8] sm:$0xff]
    %v625 = vld [vmem:[#allocation5 + $0x1e0] sm:$0xff]
    %v626 = vld [vmem:[#allocation5 + $0x1e8] sm:$0xff]
    %v627 = vld [vmem:[#allocation5 + $0x1f0] sm:$0xff]
    %v628 = vld [vmem:[#allocation5 + $0x1f8] sm:$0xff]
    %v693 = vunpack.c.l.b16 %v565
    %v694 = vunpack.c.h.b16 %v565
    %v695 = vunpack.c.l.b16 %v566
    %v696 = vunpack.c.h.b16 %v566
    %v697 = vunpack.c.l.b16 %v567
    %v698 = vunpack.c.h.b16 %v567
    %v699 = vunpack.c.l.b16 %v568
    %v700 = vunpack.c.h.b16 %v568
    %v701 = vunpack.c.l.b16 %v569
    %v702 = vunpack.c.h.b16 %v569
    %v703 = vunpack.c.l.b16 %v570
    %v704 = vunpack.c.h.b16 %v570
    %v705 = vunpack.c.l.b16 %v571
    %v706 = vunpack.c.h.b16 %v571
    %v707 = vunpack.c.l.b16 %v572
    %v708 = vunpack.c.h.b16 %v572
    %v709 = vunpack.c.l.b16 %v573
    %v710 = vunpack.c.h.b16 %v573
    %v711 = vunpack.c.l.b16 %v574
    %v712 = vunpack.c.h.b16 %v574
    %v713 = vunpack.c.l.b16 %v575
    %v714 = vunpack.c.h.b16 %v575
    %v715 = vunpack.c.l.b16 %v576
    %v716 = vunpack.c.h.b16 %v576
    %v717 = vunpack.c.l.b16 %v577
    %v718 = vunpack.c.h.b16 %v577
    %v719 = vunpack.c.l.b16 %v578
    %v720 = vunpack.c.h.b16 %v578
    %v721 = vunpack.c.l.b16 %v579
    %v722 = vunpack.c.h.b16 %v579
    %v723 = vunpack.c.l.b16 %v580
    %v724 = vunpack.c.h.b16 %v580
    %v725 = vunpack.c.l.b16 %v581
    %v726 = vunpack.c.h.b16 %v581
    %v727 = vunpack.c.l.b16 %v582
    %v728 = vunpack.c.h.b16 %v582
    %v729 = vunpack.c.l.b16 %v583
    %v730 = vunpack.c.h.b16 %v583
    %v731 = vunpack.c.l.b16 %v584
    %v732 = vunpack.c.h.b16 %v584
    %v733 = vunpack.c.l.b16 %v585
    %v734 = vunpack.c.h.b16 %v585
    %v735 = vunpack.c.l.b16 %v586
    %v736 = vunpack.c.h.b16 %v586
    %v737 = vunpack.c.l.b16 %v587
    %v738 = vunpack.c.h.b16 %v587
    %v739 = vunpack.c.l.b16 %v588
    %v740 = vunpack.c.h.b16 %v588
    %v741 = vunpack.c.l.b16 %v589
    %v742 = vunpack.c.h.b16 %v589
    %v743 = vunpack.c.l.b16 %v590
    %v744 = vunpack.c.h.b16 %v590
    %v745 = vunpack.c.l.b16 %v591
    %v746 = vunpack.c.h.b16 %v591
    %v747 = vunpack.c.l.b16 %v592
    %v748 = vunpack.c.h.b16 %v592
    %v749 = vunpack.c.l.b16 %v593
    %v750 = vunpack.c.h.b16 %v593
    %v751 = vunpack.c.l.b16 %v594
    %v752 = vunpack.c.h.b16 %v594
    %v753 = vunpack.c.l.b16 %v595
    %v754 = vunpack.c.h.b16 %v595
    %v755 = vunpack.c.l.b16 %v596
    %v756 = vunpack.c.h.b16 %v596
    %v757 = vunpack.c.l.b16 %v597
    %v758 = vunpack.c.h.b16 %v597
    %v759 = vunpack.c.l.b16 %v598
    %v760 = vunpack.c.h.b16 %v598
    %v761 = vunpack.c.l.b16 %v599
    %v762 = vunpack.c.h.b16 %v599
    %v763 = vunpack.c.l.b16 %v600
    %v764 = vunpack.c.h.b16 %v600
    %v765 = vunpack.c.l.b16 %v601
    %v766 = vunpack.c.h.b16 %v601
    %v767 = vunpack.c.l.b16 %v602
    %v768 = vunpack.c.h.b16 %v602
    %v769 = vunpack.c.l.b16 %v603
    %v770 = vunpack.c.h.b16 %v603
    %v771 = vunpack.c.l.b16 %v604
    %v772 = vunpack.c.h.b16 %v604
    %v773 = vunpack.c.l.b16 %v605
    %v774 = vunpack.c.h.b16 %v605
    %v775 = vunpack.c.l.b16 %v606
    %v776 = vunpack.c.h.b16 %v606
    %v777 = vunpack.c.l.b16 %v607
    %v778 = vunpack.c.h.b16 %v607
    %v779 = vunpack.c.l.b16 %v608
    %v780 = vunpack.c.h.b16 %v608
    %v781 = vunpack.c.l.b16 %v609
    %v782 = vunpack.c.h.b16 %v609
    %v783 = vunpack.c.l.b16 %v610
    %v784 = vunpack.c.h.b16 %v610
    %v785 = vunpack.c.l.b16 %v611
    %v786 = vunpack.c.h.b16 %v611
    %v787 = vunpack.c.l.b16 %v612
    %v788 = vunpack.c.h.b16 %v612
    %v789 = vunpack.c.l.b16 %v613
    %v790 = vunpack.c.h.b16 %v613
    %v791 = vunpack.c.l.b16 %v614
    %v792 = vunpack.c.h.b16 %v614
    %v793 = vunpack.c.l.b16 %v615
    %v794 = vunpack.c.h.b16 %v615
    %v795 = vunpack.c.l.b16 %v616
    %v796 = vunpack.c.h.b16 %v616
    %v797 = vunpack.c.l.b16 %v617
    %v798 = vunpack.c.h.b16 %v617
    %v799 = vunpack.c.l.b16 %v618
    %v800 = vunpack.c.h.b16 %v618
    %v801 = vunpack.c.l.b16 %v619
    %v802 = vunpack.c.h.b16 %v619
    %v803 = vunpack.c.l.b16 %v620
    %v804 = vunpack.c.h.b16 %v620
    %v805 = vunpack.c.l.b16 %v621
    %v806 = vunpack.c.h.b16 %v621
    %v807 = vunpack.c.l.b16 %v622
    %v808 = vunpack.c.h.b16 %v622
    %v809 = vunpack.c.l.b16 %v623
    %v810 = vunpack.c.h.b16 %v623
    %v811 = vunpack.c.l.b16 %v624
    %v812 = vunpack.c.h.b16 %v624
    %v813 = vunpack.c.l.b16 %v625
    %v814 = vunpack.c.h.b16 %v625
    %v815 = vunpack.c.l.b16 %v626
    %v816 = vunpack.c.h.b16 %v626
    %v817 = vunpack.c.l.b16 %v627
    %v818 = vunpack.c.h.b16 %v627
    %v819 = vunpack.c.l.b16 %v628
    %v820 = vunpack.c.h.b16 %v628
    %v821 = vpack.c.b16 %v695, %v693
    %v822 = vpack.c.b16 %v696, %v694
    %v823 = vpack.c.b16 %v699, %v697
    %v824 = vpack.c.b16 %v700, %v698
    %v825 = vpack.c.b16 %v703, %v701
    %v826 = vpack.c.b16 %v704, %v702
    %v827 = vpack.c.b16 %v707, %v705
    %v828 = vpack.c.b16 %v708, %v706
    %v829 = vpack.c.b16 %v711, %v709
    %v830 = vpack.c.b16 %v712, %v710
    %v831 = vpack.c.b16 %v715, %v713
    %v832 = vpack.c.b16 %v716, %v714
    %v833 = vpack.c.b16 %v719, %v717
    %v834 = vpack.c.b16 %v720, %v718
    %v835 = vpack.c.b16 %v723, %v721
    %v836 = vpack.c.b16 %v724, %v722
    %v837 = vpack.c.b16 %v727, %v725
    %v838 = vpack.c.b16 %v728, %v726
    %v839 = vpack.c.b16 %v731, %v729
    %v840 = vpack.c.b16 %v732, %v730
    %v841 = vpack.c.b16 %v735, %v733
    %v842 = vpack.c.b16 %v736, %v734
    %v843 = vpack.c.b16 %v739, %v737
    %v844 = vpack.c.b16 %v740, %v738
    %v845 = vpack.c.b16 %v743, %v741
    %v846 = vpack.c.b16 %v744, %v742
    %v847 = vpack.c.b16 %v747, %v745
    %v848 = vpack.c.b16 %v748, %v746
    %v849 = vpack.c.b16 %v751, %v749
    %v850 = vpack.c.b16 %v752, %v750
    %v851 = vpack.c.b16 %v755, %v753
    %v852 = vpack.c.b16 %v756, %v754
    %v853 = vpack.c.b16 %v759, %v757
    %v854 = vpack.c.b16 %v760, %v758
    %v855 = vpack.c.b16 %v763, %v761
    %v856 = vpack.c.b16 %v764, %v762
    %v857 = vpack.c.b16 %v767, %v765
    %v858 = vpack.c.b16 %v768, %v766
    %v859 = vpack.c.b16 %v771, %v769
    %v860 = vpack.c.b16 %v772, %v770
    %v861 = vpack.c.b16 %v775, %v773
    %v862 = vpack.c.b16 %v776, %v774
    %v863 = vpack.c.b16 %v779, %v777
    %v864 = vpack.c.b16 %v780, %v778
    %v865 = vpack.c.b16 %v783, %v781
    %v866 = vpack.c.b16 %v784, %v782
    %v867 = vpack.c.b16 %v787, %v785
    %v868 = vpack.c.b16 %v788, %v786
    %v869 = vpack.c.b16 %v791, %v789
    %v870 = vpack.c.b16 %v792, %v790
    %v871 = vpack.c.b16 %v795, %v793
    %v872 = vpack.c.b16 %v796, %v794
    %v873 = vpack.c.b16 %v799, %v797
    %v874 = vpack.c.b16 %v800, %v798
    %v875 = vpack.c.b16 %v803, %v801
    %v876 = vpack.c.b16 %v804, %v802
    %v877 = vpack.c.b16 %v807, %v805
    %v878 = vpack.c.b16 %v808, %v806
    %v879 = vpack.c.b16 %v811, %v809
    %v880 = vpack.c.b16 %v812, %v810
    %v881 = vpack.c.b16 %v815, %v813
    %v882 = vpack.c.b16 %v816, %v814
    %v883 = vpack.c.b16 %v819, %v817
    %v884 = vpack.c.b16 %v820, %v818
    %949 = vmatprep.subr.bf16.mxu0 %v822
    %950 = vmatpush1.bf16.msra.mxu0 %v821
    %951 = vmatprep.subr.bf16.mxu0 %v824
    %952 = vmatpush1.bf16.msra.mxu0 %v823
    %953 = vmatprep.subr.bf16.mxu0 %v826
    %954 = vmatpush1.bf16.msra.mxu0 %v825
    %955 = vmatprep.subr.bf16.mxu0 %v828
    %956 = vmatpush1.bf16.msra.mxu0 %v827
    %957 = vmatprep.subr.bf16.mxu0 %v830
    %958 = vmatpush1.bf16.msra.mxu0 %v829
    %959 = vmatprep.subr.bf16.mxu0 %v832
    %960 = vmatpush1.bf16.msra.mxu0 %v831
    %961 = vmatprep.subr.bf16.mxu0 %v834
    %962 = vmatpush1.bf16.msra.mxu0 %v833
    %963 = vmatprep.subr.bf16.mxu0 %v836
    %964 = vmatpush1.bf16.msra.mxu0 %v835
    %965 = vmatprep.subr.bf16.mxu0 %v838
    %966 = vmatpush1.bf16.msra.mxu0 %v837
    %967 = vmatprep.subr.bf16.mxu0 %v840
    %968 = vmatpush1.bf16.msra.mxu0 %v839
    %969 = vmatprep.subr.bf16.mxu0 %v842
    %970 = vmatpush1.bf16.msra.mxu0 %v841
    %971 = vmatprep.subr.bf16.mxu0 %v844
    %972 = vmatpush1.bf16.msra.mxu0 %v843
    %973 = vmatprep.subr.bf16.mxu0 %v846
    %974 = vmatpush1.bf16.msra.mxu0 %v845
    %975 = vmatprep.subr.bf16.mxu0 %v848
    %976 = vmatpush1.bf16.msra.mxu0 %v847
    %977 = vmatprep.subr.bf16.mxu0 %v850
    %978 = vmatpush1.bf16.msra.mxu0 %v849
    %979 = vmatprep.subr.bf16.mxu0 %v852
    %980 = vmatpush1.bf16.msra.mxu0 %v851
    %981 = vmatprep.mubr.bf16.mxu0 %v562
    %982 = vmatmul.mubr.bf16.gmra.mrb[0].mxu0 %v561
    %v983 = vpop.f32.mrb[0].mxu0
    %v984 = vadd.f32 0.0, %v983
    %v985 = vpop.f32.mrb[0].mxu0
    %v986 = vadd.f32 0.0, %v985
    %v987 = vpop.f32.mrb[0].mxu0
    %v988 = vadd.f32 0.0, %v987
    %v989 = vpop.f32.mrb[0].mxu0
    %v990 = vadd.f32 0.0, %v989
    %991 = vdwg.mxu0
    %992 = vmatprep.subr.bf16.mxu0 %v854
    %993 = vmatpush1.bf16.msra.mxu0 %v853
    %994 = vmatprep.subr.bf16.mxu0 %v856
    %995 = vmatpush1.bf16.msra.mxu0 %v855
    %996 = vmatprep.subr.bf16.mxu0 %v858
    %997 = vmatpush1.bf16.msra.mxu0 %v857
    %998 = vmatprep.subr.bf16.mxu0 %v860
    %999 = vmatpush1.bf16.msra.mxu0 %v859
    %1000 = vmatprep.subr.bf16.mxu0 %v862
    %1001 = vmatpush1.bf16.msra.mxu0 %v861
    %1002 = vmatprep.subr.bf16.mxu0 %v864
    %1003 = vmatpush1.bf16.msra.mxu0 %v863
    %1004 = vmatprep.subr.bf16.mxu0 %v866
    %1005 = vmatpush1.bf16.msra.mxu0 %v865
    %1006 = vmatprep.subr.bf16.mxu0 %v868
    %1007 = vmatpush1.bf16.msra.mxu0 %v867
    %1008 = vmatprep.subr.bf16.mxu0 %v870
    %1009 = vmatpush1.bf16.msra.mxu0 %v869
    %1010 = vmatprep.subr.bf16.mxu0 %v872
    %1011 = vmatpush1.bf16.msra.mxu0 %v871
    %1012 = vmatprep.subr.bf16.mxu0 %v874
    %1013 = vmatpush1.bf16.msra.mxu0 %v873
    %1014 = vmatprep.subr.bf16.mxu0 %v876
    %1015 = vmatpush1.bf16.msra.mxu0 %v875
    %1016 = vmatprep.subr.bf16.mxu0 %v878
    %1017 = vmatpush1.bf16.msra.mxu0 %v877
    %1018 = vmatprep.subr.bf16.mxu0 %v880
    %1019 = vmatpush1.bf16.msra.mxu0 %v879
    %1020 = vmatprep.subr.bf16.mxu0 %v882
    %1021 = vmatpush1.bf16.msra.mxu0 %v881
    %1022 = vmatprep.subr.bf16.mxu0 %v884
    %1023 = vmatpush1.bf16.msra.mxu0 %v883
    %1024 = vmatprep.mubr.bf16.mxu0 %v564
    %1025 = vmatmul.mubr.bf16.gmra.mrb[0].mxu0 %v563
    %v1026 = vpop.f32.mrb[0].mxu0
    %v1027 = vadd.f32 %v984, %v1026
    %v1028 = vpop.f32.mrb[0].mxu0
    %v1029 = vadd.f32 %v986, %v1028
    %v1030 = vpop.f32.mrb[0].mxu0
    %v1031 = vadd.f32 %v988, %v1030
    %v1032 = vpop.f32.mrb[0].mxu0
    %v1033 = vadd.f32 %v990, %v1032
    %1034 = vdwg.mxu0
    %v1035 = vmax.f32 %v1027, 0.0
    %v1036 = vmax.f32 %v1029, 0.0
    %v1037 = vmax.f32 %v1031, 0.0
    %v1038 = vmax.f32 %v1033, 0.0
    %v1039 = vpack.c.bf16 %v1037, %v1035
    %v1040 = vpack.c.bf16 %v1038, %v1036
    %v1041 = vld [vmem:[#allocation7] sm:$0xff]
    %v1042 = vld [vmem:[#allocation7 + $0x8] sm:$0xff]
    %v1043 = vld [vmem:[#allocation7 + $0x10] sm:$0xff]
    %v1044 = vld [vmem:[#allocation7 + $0x18] sm:$0xff]
    %v1045 = vld [vmem:[#allocation7 + $0x20] sm:$0xff]
    %v1046 = vld [vmem:[#allocation7 + $0x28] sm:$0xff]
    %v1047 = vld [vmem:[#allocation7 + $0x30] sm:$0xff]
    %v1048 = vld [vmem:[#allocation7 + $0x38] sm:$0xff]
    %v1049 = vld [vmem:[#allocation7 + $0x40] sm:$0xff]
    %v1050 = vld [vmem:[#allocation7 + $0x48] sm:$0xff]
    %v1051 = vld [vmem:[#allocation7 + $0x50] sm:$0xff]
    %v1052 = vld [vmem:[#allocation7 + $0x58] sm:$0xff]
    %v1053 = vld [vmem:[#allocation7 + $0x60] sm:$0xff]
    %v1054 = vld [vmem:[#allocation7 + $0x68] sm:$0xff]
    %v1055 = vld [vmem:[#allocation7 + $0x70] sm:$0xff]
    %v1056 = vld [vmem:[#allocation7 + $0x78] sm:$0xff]
    %v1057 = vld [vmem:[#allocation7 + $0x80] sm:$0xff]
    %v1058 = vld [vmem:[#allocation7 + $0x88] sm:$0xff]
    %v1059 = vld [vmem:[#allocation7 + $0x90] sm:$0xff]
    %v1060 = vld [vmem:[#allocation7 + $0x98] sm:$0xff]
    %v1061 = vld [vmem:[#allocation7 + $0xa0] sm:$0xff]
    %v1062 = vld [vmem:[#allocation7 + $0xa8] sm:$0xff]
    %v1063 = vld [vmem:[#allocation7 + $0xb0] sm:$0xff]
    %v1064 = vld [vmem:[#allocation7 + $0xb8] sm:$0xff]
    %v1065 = vld [vmem:[#allocation7 + $0xc0] sm:$0xff]
    %v1066 = vld [vmem:[#allocation7 + $0xc8] sm:$0xff]
    %v1067 = vld [vmem:[#allocation7 + $0xd0] sm:$0xff]
    %v1068 = vld [vmem:[#allocation7 + $0xd8] sm:$0xff]
    %v1069 = vld [vmem:[#allocation7 + $0xe0] sm:$0xff]
    %v1070 = vld [vmem:[#allocation7 + $0xe8] sm:$0xff]
    %v1071 = vld [vmem:[#allocation7 + $0xf0] sm:$0xff]
    %v1072 = vld [vmem:[#allocation7 + $0xf8] sm:$0xff]
    %v1105 = vunpack.c.l.b16 %v1041
    %v1106 = vunpack.c.h.b16 %v1041
    %v1107 = vunpack.c.l.b16 %v1042
    %v1108 = vunpack.c.h.b16 %v1042
    %v1109 = vunpack.c.l.b16 %v1043
    %v1110 = vunpack.c.h.b16 %v1043
    %v1111 = vunpack.c.l.b16 %v1044
    %v1112 = vunpack.c.h.b16 %v1044
    %v1113 = vunpack.c.l.b16 %v1045
    %v1114 = vunpack.c.h.b16 %v1045
    %v1115 = vunpack.c.l.b16 %v1046
    %v1116 = vunpack.c.h.b16 %v1046
    %v1117 = vunpack.c.l.b16 %v1047
    %v1118 = vunpack.c.h.b16 %v1047
    %v1119 = vunpack.c.l.b16 %v1048
    %v1120 = vunpack.c.h.b16 %v1048
    %v1121 = vunpack.c.l.b16 %v1049
    %v1122 = vunpack.c.h.b16 %v1049
    %v1123 = vunpack.c.l.b16 %v1050
    %v1124 = vunpack.c.h.b16 %v1050
    %v1125 = vunpack.c.l.b16 %v1051
    %v1126 = vunpack.c.h.b16 %v1051
    %v1127 = vunpack.c.l.b16 %v1052
    %v1128 = vunpack.c.h.b16 %v1052
    %v1129 = vunpack.c.l.b16 %v1053
    %v1130 = vunpack.c.h.b16 %v1053
    %v1131 = vunpack.c.l.b16 %v1054
    %v1132 = vunpack.c.h.b16 %v1054
    %v1133 = vunpack.c.l.b16 %v1055
    %v1134 = vunpack.c.h.b16 %v1055
    %v1135 = vunpack.c.l.b16 %v1056
    %v1136 = vunpack.c.h.b16 %v1056
    %v1137 = vunpack.c.l.b16 %v1057
    %v1138 = vunpack.c.h.b16 %v1057
    %v1139 = vunpack.c.l.b16 %v1058
    %v1140 = vunpack.c.h.b16 %v1058
    %v1141 = vunpack.c.l.b16 %v1059
    %v1142 = vunpack.c.h.b16 %v1059
    %v1143 = vunpack.c.l.b16 %v1060
    %v1144 = vunpack.c.h.b16 %v1060
    %v1145 = vunpack.c.l.b16 %v1061
    %v1146 = vunpack.c.h.b16 %v1061
    %v1147 = vunpack.c.l.b16 %v1062
    %v1148 = vunpack.c.h.b16 %v1062
    %v1149 = vunpack.c.l.b16 %v1063
    %v1150 = vunpack.c.h.b16 %v1063
    %v1151 = vunpack.c.l.b16 %v1064
    %v1152 = vunpack.c.h.b16 %v1064
    %v1153 = vunpack.c.l.b16 %v1065
    %v1154 = vunpack.c.h.b16 %v1065
    %v1155 = vunpack.c.l.b16 %v1066
    %v1156 = vunpack.c.h.b16 %v1066
    %v1157 = vunpack.c.l.b16 %v1067
    %v1158 = vunpack.c.h.b16 %v1067
    %v1159 = vunpack.c.l.b16 %v1068
    %v1160 = vunpack.c.h.b16 %v1068
    %v1161 = vunpack.c.l.b16 %v1069
    %v1162 = vunpack.c.h.b16 %v1069
    %v1163 = vunpack.c.l.b16 %v1070
    %v1164 = vunpack.c.h.b16 %v1070
    %v1165 = vunpack.c.l.b16 %v1071
    %v1166 = vunpack.c.h.b16 %v1071
    %v1167 = vunpack.c.l.b16 %v1072
    %v1168 = vunpack.c.h.b16 %v1072
    %v1169 = vpack.c.b16 %v1107, %v1105
    %v1170 = vpack.c.b16 %v1108, %v1106
    %v1171 = vpack.c.b16 %v1111, %v1109
    %v1172 = vpack.c.b16 %v1112, %v1110
    %v1173 = vpack.c.b16 %v1115, %v1113
    %v1174 = vpack.c.b16 %v1116, %v1114
    %v1175 = vpack.c.b16 %v1119, %v1117
    %v1176 = vpack.c.b16 %v1120, %v1118
    %v1177 = vpack.c.b16 %v1123, %v1121
    %v1178 = vpack.c.b16 %v1124, %v1122
    %v1179 = vpack.c.b16 %v1127, %v1125
    %v1180 = vpack.c.b16 %v1128, %v1126
    %v1181 = vpack.c.b16 %v1131, %v1129
    %v1182 = vpack.c.b16 %v1132, %v1130
    %v1183 = vpack.c.b16 %v1135, %v1133
    %v1184 = vpack.c.b16 %v1136, %v1134
    %v1185 = vpack.c.b16 %v1139, %v1137
    %v1186 = vpack.c.b16 %v1140, %v1138
    %v1187 = vpack.c.b16 %v1143, %v1141
    %v1188 = vpack.c.b16 %v1144, %v1142
    %v1189 = vpack.c.b16 %v1147, %v1145
    %v1190 = vpack.c.b16 %v1148, %v1146
    %v1191 = vpack.c.b16 %v1151, %v1149
    %v1192 = vpack.c.b16 %v1152, %v1150
    %v1193 = vpack.c.b16 %v1155, %v1153
    %v1194 = vpack.c.b16 %v1156, %v1154
    %v1195 = vpack.c.b16 %v1159, %v1157
    %v1196 = vpack.c.b16 %v1160, %v1158
    %v1197 = vpack.c.b16 %v1163, %v1161
    %v1198 = vpack.c.b16 %v1164, %v1162
    %v1199 = vpack.c.b16 %v1167, %v1165
    %v1200 = vpack.c.b16 %v1168, %v1166
    %1233 = vmatprep.subr.bf16.mxu0 %v1170
    %1234 = vmatpush1.bf16.msra.mxu0 %v1169
    %1235 = vmatprep.subr.bf16.mxu0 %v1172
    %1236 = vmatpush1.bf16.msra.mxu0 %v1171
    %1237 = vmatprep.subr.bf16.mxu0 %v1174
    %1238 = vmatpush1.bf16.msra.mxu0 %v1173
    %1239 = vmatprep.subr.bf16.mxu0 %v1176
    %1240 = vmatpush1.bf16.msra.mxu0 %v1175
    %1241 = vmatprep.subr.bf16.mxu0 %v1178
    %1242 = vmatpush1.bf16.msra.mxu0 %v1177
    %1243 = vmatprep.subr.bf16.mxu0 %v1180
    %1244 = vmatpush1.bf16.msra.mxu0 %v1179
    %1245 = vmatprep.subr.bf16.mxu0 %v1182
    %1246 = vmatpush1.bf16.msra.mxu0 %v1181
    %1247 = vmatprep.subr.bf16.mxu0 %v1184
    %1248 = vmatpush1.bf16.msra.mxu0 %v1183
    %1249 = vmatprep.subr.bf16.mxu0 %v1186
    %1250 = vmatpush1.bf16.msra.mxu0 %v1185
    %1251 = vmatprep.subr.bf16.mxu0 %v1188
    %1252 = vmatpush1.bf16.msra.mxu0 %v1187
    %1253 = vmatprep.subr.bf16.mxu0 %v1190
    %1254 = vmatpush1.bf16.msra.mxu0 %v1189
    %1255 = vmatprep.subr.bf16.mxu0 %v1192
    %1256 = vmatpush1.bf16.msra.mxu0 %v1191
    %1257 = vmatprep.subr.bf16.mxu0 %v1194
    %1258 = vmatpush1.bf16.msra.mxu0 %v1193
    %1259 = vmatprep.subr.bf16.mxu0 %v1196
    %1260 = vmatpush1.bf16.msra.mxu0 %v1195
    %1261 = vmatprep.subr.bf16.mxu0 %v1198
    %1262 = vmatpush1.bf16.msra.mxu0 %v1197
    %1263 = vmatprep.subr.bf16.mxu0 %v1200
    %1264 = vmatpush1.bf16.msra.mxu0 %v1199
    %1265 = vmatprep.mubr.bf16.mxu0 %v1040
    %1266 = vmatmul.mubr.bf16.gmra.mrb[0].mxu0 %v1039
    %v1267 = vpop.f32.mrb[0].mxu0
    %v1268 = vadd.f32 0.0, %v1267
    %v1269 = vpop.f32.mrb[0].mxu0
    %v1270 = vadd.f32 0.0, %v1269
    %v1271 = vpop.f32.mrb[0].mxu0
    %v1272 = vadd.f32 0.0, %v1271
    %v1273 = vpop.f32.mrb[0].mxu0
    %v1274 = vadd.f32 0.0, %v1273
    %1275 = vdwg.mxu0
    %v1276 = vmax.f32 %v1268, 0.0
    %v1277 = vmax.f32 %v1270, 0.0
    %v1278 = vmax.f32 %v1272, 0.0
    %v1279 = vmax.f32 %v1274, 0.0
    %v1280 = vpack.c.bf16 %v1278, %v1276
    %v1281 = vpack.c.bf16 %v1279, %v1277
    %v1282 = vld [vmem:[#allocation8] sm:$0xf]
    %v1283 = vld [vmem:[#allocation8 + $0x4] sm:$0xf]
    %v1284 = vld [vmem:[#allocation8 + $0x8] sm:$0xf]
    %v1285 = vld [vmem:[#allocation8 + $0xc] sm:$0xf]
    %v1286 = vld [vmem:[#allocation8 + $0x10] sm:$0xf]
    %v1287 = vld [vmem:[#allocation8 + $0x14] sm:$0xf]
    %v1288 = vld [vmem:[#allocation8 + $0x18] sm:$0xf]
    %v1289 = vld [vmem:[#allocation8 + $0x1c] sm:$0xf]
    %v1290 = vld [vmem:[#allocation8 + $0x20] sm:$0xf]
    %v1291 = vld [vmem:[#allocation8 + $0x24] sm:$0xf]
    %v1292 = vld [vmem:[#allocation8 + $0x28] sm:$0xf]
    %v1293 = vld [vmem:[#allocation8 + $0x2c] sm:$0xf]
    %v1294 = vld [vmem:[#allocation8 + $0x30] sm:$0xf]
    %v1295 = vld [vmem:[#allocation8 + $0x34] sm:$0xf]
    %v1296 = vld [vmem:[#allocation8 + $0x38] sm:$0xf]
    %v1297 = vld [vmem:[#allocation8 + $0x3c] sm:$0xf]
    %v1298 = vld [vmem:[#allocation8 + $0x40] sm:$0xf]
    %v1299 = vld [vmem:[#allocation8 + $0x44] sm:$0xf]
    %v1300 = vld [vmem:[#allocation8 + $0x48] sm:$0xf]
    %v1301 = vld [vmem:[#allocation8 + $0x4c] sm:$0xf]
    %v1302 = vld [vmem:[#allocation8 + $0x50] sm:$0xf]
    %v1303 = vld [vmem:[#allocation8 + $0x54] sm:$0xf]
    %v1304 = vld [vmem:[#allocation8 + $0x58] sm:$0xf]
    %v1305 = vld [vmem:[#allocation8 + $0x5c] sm:$0xf]
    %v1306 = vld [vmem:[#allocation8 + $0x60] sm:$0xf]
    %v1307 = vld [vmem:[#allocation8 + $0x64] sm:$0xf]
    %v1308 = vld [vmem:[#allocation8 + $0x68] sm:$0xf]
    %v1309 = vld [vmem:[#allocation8 + $0x6c] sm:$0xf]
    %v1310 = vld [vmem:[#allocation8 + $0x70] sm:$0xf]
    %v1311 = vld [vmem:[#allocation8 + $0x74] sm:$0xf]
    %v1312 = vld [vmem:[#allocation8 + $0x78] sm:$0xf]
    %v1313 = vld [vmem:[#allocation8 + $0x7c] sm:$0xf]
    %v1346 = vunpack.c.l.b16 %v1282
    %v1347 = vunpack.c.l.b16 %v1283
    %v1348 = vunpack.c.l.b16 %v1284
    %v1349 = vunpack.c.l.b16 %v1285
    %v1350 = vunpack.c.l.b16 %v1286
    %v1351 = vunpack.c.l.b16 %v1287
    %v1352 = vunpack.c.l.b16 %v1288
    %v1353 = vunpack.c.l.b16 %v1289
    %v1354 = vunpack.c.l.b16 %v1290
    %v1355 = vunpack.c.l.b16 %v1291
    %v1356 = vunpack.c.l.b16 %v1292
    %v1357 = vunpack.c.l.b16 %v1293
    %v1358 = vunpack.c.l.b16 %v1294
    %v1359 = vunpack.c.l.b16 %v1295
    %v1360 = vunpack.c.l.b16 %v1296
    %v1361 = vunpack.c.l.b16 %v1297
    %v1362 = vunpack.c.l.b16 %v1298
    %v1363 = vunpack.c.l.b16 %v1299
    %v1364 = vunpack.c.l.b16 %v1300
    %v1365 = vunpack.c.l.b16 %v1301
    %v1366 = vunpack.c.l.b16 %v1302
    %v1367 = vunpack.c.l.b16 %v1303
    %v1368 = vunpack.c.l.b16 %v1304
    %v1369 = vunpack.c.l.b16 %v1305
    %v1370 = vunpack.c.l.b16 %v1306
    %v1371 = vunpack.c.l.b16 %v1307
    %v1372 = vunpack.c.l.b16 %v1308
    %v1373 = vunpack.c.l.b16 %v1309
    %v1374 = vunpack.c.l.b16 %v1310
    %v1375 = vunpack.c.l.b16 %v1311
    %v1376 = vunpack.c.l.b16 %v1312
    %v1377 = vunpack.c.l.b16 %v1313
    %v1378 = vpack.c.b16 %v1347, %v1346
    %v1379 = vpack.c.b16 %v1349, %v1348
    %v1380 = vpack.c.b16 %v1351, %v1350
    %v1381 = vpack.c.b16 %v1353, %v1352
    %v1382 = vpack.c.b16 %v1355, %v1354
    %v1383 = vpack.c.b16 %v1357, %v1356
    %v1384 = vpack.c.b16 %v1359, %v1358
    %v1385 = vpack.c.b16 %v1361, %v1360
    %v1386 = vpack.c.b16 %v1363, %v1362
    %v1387 = vpack.c.b16 %v1365, %v1364
    %v1388 = vpack.c.b16 %v1367, %v1366
    %v1389 = vpack.c.b16 %v1369, %v1368
    %v1390 = vpack.c.b16 %v1371, %v1370
    %v1391 = vpack.c.b16 %v1373, %v1372
    %v1392 = vpack.c.b16 %v1375, %v1374
    %v1393 = vpack.c.b16 %v1377, %v1376
    %1410 = vmatprep.subr.bf16.mxu0 0
    %1411 = vmatpush1.bf16.msra.mxu0 %v1378
    %1412 = vmatprep.subr.bf16.mxu0 0
    %1413 = vmatpush1.bf16.msra.mxu0 %v1379
    %1414 = vmatprep.subr.bf16.mxu0 0
    %1415 = vmatpush1.bf16.msra.mxu0 %v1380
    %1416 = vmatprep.subr.bf16.mxu0 0
    %1417 = vmatpush1.bf16.msra.mxu0 %v1381
    %1418 = vmatprep.subr.bf16.mxu0 0
    %1419 = vmatpush1.bf16.msra.mxu0 %v1382
    %1420 = vmatprep.subr.bf16.mxu0 0
    %1421 = vmatpush1.bf16.msra.mxu0 %v1383
    %1422 = vmatprep.subr.bf16.mxu0 0
    %1423 = vmatpush1.bf16.msra.mxu0 %v1384
    %1424 = vmatprep.subr.bf16.mxu0 0
    %1425 = vmatpush1.bf16.msra.mxu0 %v1385
    %1426 = vmatprep.subr.bf16.mxu0 0
    %1427 = vmatpush1.bf16.msra.mxu0 %v1386
    %1428 = vmatprep.subr.bf16.mxu0 0
    %1429 = vmatpush1.bf16.msra.mxu0 %v1387
    %1430 = vmatprep.subr.bf16.mxu0 0
    %1431 = vmatpush1.bf16.msra.mxu0 %v1388
    %1432 = vmatprep.subr.bf16.mxu0 0
    %1433 = vmatpush1.bf16.msra.mxu0 %v1389
    %1434 = vmatprep.subr.bf16.mxu0 0
    %1435 = vmatpush1.bf16.msra.mxu0 %v1390
    %1436 = vmatprep.subr.bf16.mxu0 0
    %1437 = vmatpush1.bf16.msra.mxu0 %v1391
    %1438 = vmatprep.subr.bf16.mxu0 0
    %1439 = vmatpush1.bf16.msra.mxu0 %v1392
    %1440 = vmatprep.subr.bf16.mxu0 0
    %1441 = vmatpush1.bf16.msra.mxu0 %v1393
    %1442 = vmatprep.mubr.bf16.mxu0 %v1281
    %1443 = vmatmul.mubr.bf16.gmra.mrb[0].mxu0 %v1280
    %v1444 = vpop.f32.mrb[0].mxu0
    %v1445 = vadd.f32 0.0, %v1444
    %v1446 = vpop.f32.mrb[0].mxu0
    %v1447 = vpop.f32.mrb[0].mxu0
    %v1448 = vadd.f32 0.0, %v1447
    %v1449 = vpop.f32.mrb[0].mxu0
    %1450 = vdwg.mxu0
    %1451 = vst [vmem:[#allocation10] sm:$0xff] %v1445
    %1452 = vst [vmem:[#allocation10 + $0x8] sm:$0xff] %v1448
    // Predicated region
    $region38: #{ln4_forward_fused.1} parent=1 // pred_check
      _
    $region39: #{ln4_forward_fused.1} parent=1 // pred_check_branch
      %1454 = sbr.rel (0) target = $region41
    $region40: #{ln4_forward_fused.1} parent=1 // pred_region
      %s1456 = ssub.s32 256, 256
      %1457 = vsyncadd [#allocation4], %s1456
      %s1458 = sshll.u32 [#allocation10], 4
      %s1459 = int_to_ptr.vmem [resolvable:$true] %s1458
      %1464 = dma.vmem_to_hbm [thread:$0]  %s1459, 256, %s5, [#allocation4], 128, 128, 8
    $region41: #{ln4_forward_fused.1} parent=1 // pred_fallthru
      _
    // Predicated region
    $region42: #{ln4_forward_fused.1} parent=1 // pred_check
      _
    $region43: #{ln4_forward_fused.1} parent=1 // pred_check_branch
      %1466 = sbr.rel (0) target = $region45
    $region44: #{ln4_forward_fused.1} parent=1 // pred_region
      %1467 = dma.done [#allocation4], 256
    $region45: #{ln4_forward_fused.1} parent=1 // pred_fallthru
      _
    %1468 = vsyncpa [#allocation3], 1
    %1469 = vsyncpa [#allocation6], 1
    %1470 = vsyncpa [#allocation9], 1
    %1471 = vsyncpa [#allocation4], 1

</llo_original>
